<compile_context>
chip_gen: v7x
topology: tpu7x:2x2x1
jax: 0.10.0
libtpu: 0.0.40
codegen_flags: <defaults>
</compile_context>

<pallas_src>
from functools import partial

import jax
import jax.numpy as jnp
from jax.experimental import pallas as pl
from jax.experimental.pallas import tpu as pltpu

INPUT_DIM = 60
OUTPUT_DIM = 10
LANE = 128          # TPU lane width: weight columns padded to a multiple of this
DEFAULT_TM = 1024   # rows per grid step (multiple of 8)


# ----------------------------------------------------------------------------
# Pallas kernel
# ----------------------------------------------------------------------------
def _linear_kernel(x_ref, w_ref, b_ref, y_ref):
    """y = (x @ w_padded)[:, :N] + b for one (TM, K) tile; f32 accumulation on MXU."""
    n_out = y_ref.shape[-1]
    acc = jnp.dot(x_ref[...], w_ref[...], preferred_element_type=jnp.float32)
    y_ref[...] = (acc[:, :n_out] + b_ref[...]).astype(y_ref.dtype)


def _choose_tm(m, tm):
    """Row-tile size: <= tm, multiple of 8, and >= 2 blocks when enough work (v7x)."""
    half = ((m + 1) // 2 + 7) // 8 * 8      # round_up(cdiv(M, 2), 8)
    tm_eff = max(8, min(tm, half))
    if tm_eff >= m:
        tm_eff = m                          # single full block (block == array dim is legal)
    return tm_eff


def linear_pallas(x2d, w_kn, b_1n, tm=DEFAULT_TM):
    """Pallas GEMM + bias.  x2d:(M,K) f32, w_kn:(K,Np) lane-padded, b_1n:(1,N)."""
    M, K = x2d.shape
    Kw, Np = w_kn.shape
    _, N = b_1n.shape
    assert K == Kw and Np % LANE == 0 and N <= Np

    tm_eff = _choose_tm(M, tm)
    grid = (pl.cdiv(M, tm_eff),)            # ragged last block handled by Pallas masking

    return pl.pallas_call(
        _linear_kernel,
        out_shape=jax.ShapeDtypeStruct((M, N), jnp.float32),
        grid=grid,
        in_specs=[
            pl.BlockSpec((tm_eff, K), lambda i: (i, 0)),   # x rows: tiled over M
            pl.BlockSpec((K, Np), lambda i: (0, 0)),       # weight: resident (lane-padded)
            pl.BlockSpec((1, N), lambda i: (0, 0)),        # bias: resident, natural width
        ],
        out_specs=pl.BlockSpec((tm_eff, N), lambda i: (i, 0)),   # unpadded N writeback
        compiler_params=pltpu.CompilerParams(
            dimension_semantics=("parallel",),             # megacore-shardable M axis
        ),
    )(x2d, w_kn, b_1n)


# ----------------------------------------------------------------------------
# Parameters (PyTorch nn.Linear init) + one-time layout prep
# ----------------------------------------------------------------------------
def init_params(key, input_dim=INPUT_DIM, output_dim=OUTPUT_DIM):
    kw, kb = jax.random.split(key)
    bound = 1.0 / (input_dim ** 0.5)
    return {
        "fc_w": jax.random.uniform(kw, (output_dim, input_dim), jnp.float32,
                                   -bound, bound),          # PyTorch (out, in)
        "fc_b": jax.random.uniform(kb, (output_dim,), jnp.float32, -bound, bound),
    }


def prepare_params(params, lane=LANE):
    """Pre-transpose weight to (K, N) and zero-pad N to a lane-dense multiple of 128.

    Bias stays at its natural (1, N) shape: only the MXU RHS is padded, the
    output/store path is unpadded.
    """
    w = params["fc_w"]                      # (N, K)
    b = params["fc_b"]                      # (N,)
    n, k = w.shape
    n_pad = -(-n // lane) * lane
    w_kn = jnp.zeros((k, n_pad), jnp.float32).at[:, :n].set(w.T)
    b_1n = b.reshape(1, n).astype(jnp.float32)
    return {"w_kn": w_kn, "b_1n": b_1n}


# ----------------------------------------------------------------------------
# FC_SYN forward: returns (x, fc(x))
# ----------------------------------------------------------------------------
@jax.jit
def fc_syn_forward(x, w_kn, b_1n):
    lead = x.shape[:-1]
    x2d = x.reshape((-1, x.shape[-1]))
    y = linear_pallas(x2d, w_kn, b_1n)
    return x, y.reshape(lead + (b_1n.shape[-1],))


if __name__ == "__main__":
    key = jax.random.PRNGKey(0)
    pkey, xkey, xkey2 = jax.random.split(key, 3)

    params = init_params(pkey)
    prepped = prepare_params(params)

    # Small demo batch.
    batch = 8
    x = jax.random.normal(xkey, (batch, INPUT_DIM), dtype=jnp.float32)

    x_out, y = fc_syn_forward(x, prepped["w_kn"], prepped["b_1n"])
    jax.block_until_ready((x_out, y))

    assert x_out.shape == (batch, INPUT_DIM), x_out.shape
    assert y.shape == (batch, OUTPUT_DIM), y.shape

    y_ref = x @ params["fc_w"].T + params["fc_b"]
    assert jnp.allclose(x_out, x)
    assert jnp.allclose(y, y_ref, atol=1e-5, rtol=1e-5), float(jnp.abs(y - y_ref).max())

    # Secondary check: multi-block grid with a ragged last block (exercises
    # the masked writeback path and the >=2-block megacore split).
    m2 = 300
    x2 = jax.random.normal(xkey2, (m2, INPUT_DIM), dtype=jnp.float32)
    _, y2 = fc_syn_forward(x2, prepped["w_kn"], prepped["b_1n"])
    jax.block_until_ready(y2)
    y2_ref = x2 @ params["fc_w"].T + params["fc_b"]
    assert y2.shape == (m2, OUTPUT_DIM)
    assert jnp.allclose(y2, y2_ref, atol=1e-5, rtol=1e-5), float(jnp.abs(y2 - y2_ref).max())

    print("KERNEL_OK")
</pallas_src>

<mosaic_0001>
module attributes {stable_mosaic.version = 11 : i64} {
  func.func @_linear_kernel(%arg0: i32, %arg1: memref<8x60xf32, #tpu.memory_space<vmem>>, %arg2: memref<60x128xf32, #tpu.memory_space<vmem>>, %arg3: memref<1x10xf32, #tpu.memory_space<vmem>>, %arg4: memref<8x10xf32, #tpu.memory_space<vmem>>) attributes {dimension_semantics = [#tpu.dimension_semantics<parallel>], iteration_bounds = array<i64: 1>, scalar_prefetch = 0 : i64, scratch_operands = 0 : i64, tpu.core_type = #tpu.core_type<tc>, window_params = [{transform_indices = @transform_0, window_bounds = array<i64: 8, 60>}, {pipeline_mode = #tpu.pipeline_mode<synchronous>, transform_indices = @transform_1, window_bounds = array<i64: 60, 128>}, {pipeline_mode = #tpu.pipeline_mode<synchronous>, transform_indices = @transform_2, window_bounds = array<i64: 1, 10>}, {transform_indices = @transform_3, window_bounds = array<i64: 8, 10>}]} {
    %c0 = arith.constant 0 : index
    %c0_0 = arith.constant 0 : index
    %0 = vector.load %arg1[%c0, %c0_0] : memref<8x60xf32, #tpu.memory_space<vmem>>, vector<8x60xf32>
    %c0_1 = arith.constant 0 : index
    %c0_2 = arith.constant 0 : index
    %1 = vector.load %arg2[%c0_1, %c0_2] : memref<60x128xf32, #tpu.memory_space<vmem>>, vector<60x128xf32>
    %cst = arith.constant dense<0.000000e+00> : vector<8x128xf32>
    %2 = tpu.matmul %0, %1, %cst {dimension_numbers = #tpu.dot_dimension_numbers<[1], [0], [0], [1], [0, 0, 1, 1], [], []>} : vector<8x60xf32>, vector<60x128xf32>, vector<8x128xf32> -> vector<8x128xf32>
    %3 = vector.extract_strided_slice %2 {offsets = [0, 0], sizes = [8, 10], strides = [1, 1]} : vector<8x128xf32> to vector<8x10xf32>
    %c0_3 = arith.constant 0 : index
    %c0_4 = arith.constant 0 : index
    %4 = vector.load %arg3[%c0_3, %c0_4] : memref<1x10xf32, #tpu.memory_space<vmem>>, vector<1x10xf32>
    %5 = vector.broadcast %4 : vector<1x10xf32> to vector<8x10xf32>
    %6 = arith.addf %3, %5 : vector<8x10xf32>
    %c0_5 = arith.constant 0 : index
    %c0_6 = arith.constant 0 : index
    %7 = vector.load %arg4[%c0_5, %c0_6] : memref<8x10xf32, #tpu.memory_space<vmem>>, vector<8x10xf32>
    tpu.vector_store %arg4[%c0_5, %c0_6], %6 {strides = array<i32>} : memref<8x10xf32, #tpu.memory_space<vmem>>, vector<8x10xf32>,
    return
  }
  func.func @transform_0(%arg0: i32) -> (i32, i32) {
    %c0_i32 = arith.constant 0 : i32
    %c0_i32_0 = arith.constant 0 : i32
    return %arg0, %c0_i32 : i32, i32
  }
  func.func @transform_1(%arg0: i32) -> (i32, i32) {
    %c0_i32 = arith.constant 0 : i32
    %c0_i32_0 = arith.constant 0 : i32
    %c0_i32_1 = arith.constant 0 : i32
    return %c0_i32, %c0_i32_0 : i32, i32
  }
  func.func @transform_2(%arg0: i32) -> (i32, i32) {
    %c0_i32 = arith.constant 0 : i32
    %c0_i32_0 = arith.constant 0 : i32
    %c0_i32_1 = arith.constant 0 : i32
    return %c0_i32, %c0_i32_0 : i32, i32
  }
  func.func @transform_3(%arg0: i32) -> (i32, i32) {
    %c0_i32 = arith.constant 0 : i32
    %c0_i32_0 = arith.constant 0 : i32
    return %arg0, %c0_i32 : i32, i32
  }
}

</mosaic_0001>

<llo_original>
// kernel: fc_syn_forward.1
$region0: #{fc_syn_forward.1}
  #allocation0 [shape = 'u32[]', space=smem, size = 0x4, offset = 0x4, fixed_abs, tag = 'smem constant byte address 0x4 - core index']
  #allocation1 [shape = 'u32[144,128]{1,0:T(1,128)}', space=vmem, size = 0x12000, scoped, tag = 'internal scratch']
  %s0 = inlined_call_operand.hbm [shape: f32[8,60], index: 0, kind: input, shape index: {}]
  %s1 = inlined_call_operand.hbm [shape: f32[60,128], index: 1, kind: input, shape index: {}]
  %s2 = inlined_call_operand.vmem [shape: f32[1,10], index: 2, kind: input, shape index: {}]
  %s3 = inlined_call_operand.hbm [shape: f32[8,10], index: 3, kind: output, shape index: {}]
  %s4 = sld [smem:[#allocation0]]
  $region30: #{fc_syn_forward.1} parent=0
    _
  %s6 = ssub.s32 1, %s4
  %s7 = scalar_select 0, %s6, %s4
  $region1: #{fc_syn_forward.1} parent=0
    #allocation2 [shape = 'u8[4096]{0}', space=vmem, size = 0x1000, scoped, tag = 'input window, operand 0, single buffered']
    #allocation3 [shape = 's32[1]{0}', space=sflag, size = 0x4, scoped, tag = 'scoped memory for fc_syn_forward.1']
    #allocation4 [shape = 's32[1]{0}', space=sflag, size = 0x4, scoped, tag = 'scoped memory for fc_syn_forward.1']
    #allocation5 [shape = 'u8[32768]{0}', space=vmem, size = 0x8000, scoped, tag = 'input window, operand 1, single buffered']
    #allocation6 [shape = 's32[1]{0}', space=sflag, size = 0x4, scoped, tag = 'scoped memory for fc_syn_forward.1']
    #allocation7 [shape = 'u8[4096]{0}', space=vmem, size = 0x1000, scoped, tag = 'output window, operand 0, single buffered']
    %8 = vsyncpa [#allocation3], 0
    %9 = vsyncpa [#allocation6], 0
    %10 = vsyncpa [#allocation4], 0
    // Predicated region
    $region2: #{fc_syn_forward.1} parent=1 // pred_check
      _
    $region3: #{fc_syn_forward.1} parent=1 // pred_check_branch
      %12 = sbr.rel (0) target = $region5
    $region4: #{fc_syn_forward.1} parent=1 // pred_region
      %s14 = ssub.s32 128, 128
      %15 = vsyncadd [#allocation3], %s14
      %s17 = sshll.u32 [#allocation2], 4
      %s18 = int_to_ptr.vmem [resolvable:$true] %s17
      %20 = dma.hbm_to_vmem [thread:$0]  %s0, 128, %s18, [#allocation3]
    $region5: #{fc_syn_forward.1} parent=1 // pred_fallthru
      _
    // Predicated region
    $region6: #{fc_syn_forward.1} parent=1 // pred_check
      _
    $region7: #{fc_syn_forward.1} parent=1 // pred_check_branch
      %22 = sbr.rel (0) target = $region9
    $region8: #{fc_syn_forward.1} parent=1 // pred_region
      %s24 = ssub.s32 1024, 1024
      %25 = vsyncadd [#allocation6], %s24
      %s26 = sshll.u32 [#allocation5], 4
      %s27 = int_to_ptr.vmem [resolvable:$true] %s26
      %32 = dma.hbm_to_vmem [thread:$0]  %s1, 1024, %s27, [#allocation6], 128, 128, 8
    $region9: #{fc_syn_forward.1} parent=1 // pred_fallthru
      _
    // Predicated region
    $region10: #{fc_syn_forward.1} parent=1 // pred_check
      _
    $region11: #{fc_syn_forward.1} parent=1 // pred_check_branch
      %34 = sbr.rel (0) target = $region13
    $region12: #{fc_syn_forward.1} parent=1 // pred_region
      _
    $region13: #{fc_syn_forward.1} parent=1 // pred_fallthru
      _
    // Predicated region
    $region14: #{fc_syn_forward.1} parent=1 // pred_check
      _
    $region15: #{fc_syn_forward.1} parent=1 // pred_check_branch
      %36 = sbr.rel (0) target = $region17
    $region16: #{fc_syn_forward.1} parent=1 // pred_region
      %37 = dma.done [#allocation3], 128
    $region17: #{fc_syn_forward.1} parent=1 // pred_fallthru
      _
    // Predicated region
    $region18: #{fc_syn_forward.1} parent=1 // pred_check
      _
    $region19: #{fc_syn_forward.1} parent=1 // pred_check_branch
      %39 = sbr.rel (0) target = $region21
    $region20: #{fc_syn_forward.1} parent=1 // pred_region
      %40 = dma.done [#allocation6], 1024
    $region21: #{fc_syn_forward.1} parent=1 // pred_fallthru
      _
    %v41 = vld [vmem:[#allocation2] sm:$0xff]
    %v42 = vld [vmem:[#allocation5] sm:$0xff]
    %v43 = vld [vmem:[#allocation5 + $0x8] sm:$0xff]
    %v44 = vld [vmem:[#allocation5 + $0x10] sm:$0xff]
    %v45 = vld [vmem:[#allocation5 + $0x18] sm:$0xff]
    %v46 = vld [vmem:[#allocation5 + $0x20] sm:$0xff]
    %v47 = vld [vmem:[#allocation5 + $0x28] sm:$0xff]
    %v48 = vld [vmem:[#allocation5 + $0x30] sm:$0xff]
    %v49 = vld [vmem:[#allocation5 + $0x38] sm:$0xf]
    %vm50 = vcmask 490496
    %v52 = vsel %vm50, %v41, 0
    %vm54 = vcmask 1043456
    %v56 = vsel %vm54, %v49, 0
    %58 = vmatprep.subr.mxu0 0.0
    %59 = vmatpush1.msra.mxu0 %v42
    %60 = vmatprep.subr.mxu0 0.0
    %61 = vmatpush1.msra.mxu0 %v43
    %62 = vmatprep.subr.mxu0 0.0
    %63 = vmatpush1.msra.mxu0 %v44
    %64 = vmatprep.subr.mxu0 0.0
    %65 = vmatpush1.msra.mxu0 %v45
    %66 = vmatprep.subr.mxu0 0.0
    %67 = vmatpush1.msra.mxu0 %v46
    %68 = vmatprep.subr.mxu0 0.0
    %69 = vmatpush1.msra.mxu0 %v47
    %70 = vmatprep.subr.mxu0 0.0
    %71 = vmatpush1.msra.mxu0 %v48
    %72 = vmatprep.subr.mxu0 0.0
    %73 = vmatpush1.msra.mxu0 %v56
    %74 = vmatprep.subr.mxu0 0.0
    %75 = vmatpush1.msra.mxu0 0.0
    %76 = vmatprep.subr.mxu0 0.0
    %77 = vmatpush1.msra.mxu0 0.0
    %78 = vmatprep.subr.mxu0 0.0
    %79 = vmatpush1.msra.mxu0 0.0
    %80 = vmatprep.subr.mxu0 0.0
    %81 = vmatpush1.msra.mxu0 0.0
    %82 = vmatprep.subr.mxu0 0.0
    %83 = vmatpush1.msra.mxu0 0.0
    %84 = vmatprep.subr.mxu0 0.0
    %85 = vmatpush1.msra.mxu0 0.0
    %86 = vmatprep.subr.mxu0 0.0
    %87 = vmatpush1.msra.mxu0 0.0
    %88 = vmatprep.subr.mxu0 0.0
    %89 = vmatpush1.msra.mxu0 0.0
    %90 = vmatprep.subr.mxu0 0.0
    %91 = vmatpush1.msra.mxu0 0.0
    %92 = vmatprep.subr.mxu0 0.0
    %93 = vmatpush1.msra.mxu0 0.0
    %94 = vmatprep.subr.mxu0 0.0
    %95 = vmatpush1.msra.mxu0 0.0
    %96 = vmatprep.subr.mxu0 0.0
    %97 = vmatpush1.msra.mxu0 0.0
    %98 = vmatprep.subr.mxu0 0.0
    %99 = vmatpush1.msra.mxu0 0.0
    %100 = vmatprep.subr.mxu0 0.0
    %101 = vmatpush1.msra.mxu0 0.0
    %102 = vmatprep.subr.mxu0 0.0
    %103 = vmatpush1.msra.mxu0 0.0
    %104 = vmatprep.subr.mxu0 0.0
    %105 = vmatpush1.msra.mxu0 0.0
    %106 = vmatprep.subr.mxu0 0.0
    %107 = vmatpush1.msra.mxu0 0.0
    %108 = vmatprep.subr.mxu0 0.0
    %109 = vmatpush1.msra.mxu0 0.0
    %110 = vmatprep.subr.mxu0 0.0
    %111 = vmatpush1.msra.mxu0 0.0
    %112 = vmatprep.subr.mxu0 0.0
    %113 = vmatpush1.msra.mxu0 0.0
    %114 = vmatprep.subr.mxu0 0.0
    %115 = vmatpush1.msra.mxu0 0.0
    %116 = vmatprep.subr.mxu0 0.0
    %117 = vmatpush1.msra.mxu0 0.0
    %118 = vmatprep.subr.mxu0 0.0
    %119 = vmatpush1.msra.mxu0 0.0
    %120 = vmatprep.subr.mxu0 0.0
    %121 = vmatpush1.msra.mxu0 0.0
    %122 = vmatprep.mubr.f32.mxu0 0.0
    %123 = vmatmul.mubr.f32.gmra.mrb[0].mxu0 %v52
    %v124 = vpop.f32.mrb[0].mxu0
    %v125 = vadd.f32 0.0, %v124
    %v126 = vpop.f32.mrb[0].mxu0
    %127 = vdwg.mxu0
    %v128 = vld [vmem:[%s2] sm:$0x1]
    %v130 = vlaneseq
    %v131 = vshrl.u32 %v130, 7
    %v132 = vsub.s32 0, %v131
    %v133 = vrot.slane %v128, %v132
    %v135 = vadd.f32 %v125, %v133
    %vm136 = vcmask 80896
    %137 = vst.msk [vmem:[#allocation7] sm:$0xff] %vm136, %v135
    // Predicated region
    $region22: #{fc_syn_forward.1} parent=1 // pred_check
      _
    $region23: #{fc_syn_forward.1} parent=1 // pred_check_branch
      %139 = sbr.rel (0) target = $region25
    $region24: #{fc_syn_forward.1} parent=1 // pred_region
      %s141 = ssub.s32 128, 128
      %142 = vsyncadd [#allocation4], %s141
      %s144 = sshll.u32 [#allocation7], 4
      %s145 = int_to_ptr.vmem [resolvable:$true] %s144
      %147 = dma.vmem_to_hbm [thread:$0]  %s145, 128, %s3, [#allocation4]
    $region25: #{fc_syn_forward.1} parent=1 // pred_fallthru
      _
    // Predicated region
    $region26: #{fc_syn_forward.1} parent=1 // pred_check
      _
    $region27: #{fc_syn_forward.1} parent=1 // pred_check_branch
      %149 = sbr.rel (0) target = $region29
    $region28: #{fc_syn_forward.1} parent=1 // pred_region
      %150 = dma.done [#allocation4], 128
    $region29: #{fc_syn_forward.1} parent=1 // pred_fallthru
      _
    %151 = vsyncpa [#allocation3], 1
    %152 = vsyncpa [#allocation6], 1
    %153 = vsyncpa [#allocation4], 1

</llo_original>
